<compile_context>
chip_gen: v7x
topology: tpu7x:2x2x1
jax: 0.10.0
libtpu: 0.0.40
codegen_flags: <defaults>
</compile_context>

<pallas_src>
import functools

import numpy as np
import jax
import jax.numpy as jnp
from jax.experimental import pallas as pl
from jax.experimental.pallas import tpu as pltpu

_LANE = 1024                 # lane-dense fallback width (large multiple of 128)
_MAX_NATIVE_LANE = 16384     # cap when using x's own last dim as the lane axis
_TARGET_BLOCK_BYTES = 4 << 20   # ~4 MiB per block
_VMEM_LIMIT_BYTES = 24 << 20    # in+out double-buffered blocks fit with headroom
_STATIC_UNROLL_MAX = 16         # above this, use SMEM tables + fori_loop


def _cdiv(a, b):
    return -(-a // b)


def _round_up(a, b):
    return _cdiv(a, b) * b


def _sublane_granule(dtype):
    # (8,128) for 32-bit, (16,128) for bf16, (32,128) for int8/fp8.
    return max(8, 32 // jnp.dtype(dtype).itemsize)


def _compute_dtype_for(x_dtype):
    """bf16 accumulation only where the VPU has bf16 (v6e / v7x); f32 otherwise."""
    if jnp.dtype(x_dtype) != jnp.dtype(jnp.bfloat16):
        return jnp.float32
    try:
        kind = jax.devices()[0].device_kind.lower()
    except Exception:
        return jnp.float32
    return jnp.bfloat16 if ("v6" in kind or "v7" in kind) else jnp.float32


def _pwl_const_kernel(y0, xpts, coefs, compute_dtype, x_ref, o_ref):
    """f(x) = y0 + sum_j coefs[j] * relu(x - xpts[j]); breakpoints are immediates."""
    x = x_ref[...].astype(compute_dtype)
    f = jnp.full_like(x, y0)
    for xj, cj in zip(xpts, coefs):
        f = f + cj * jnp.maximum(x - xj, 0.0)
    o_ref[...] = f.astype(o_ref.dtype)


def _pwl_table_kernel(n_pts, y0, compute_dtype, xpts_ref, coef_ref, x_ref, o_ref):
    """Large breakpoint tables: SMEM tables + fori_loop keeps code size / vregs flat."""
    x = x_ref[...].astype(compute_dtype)

    def body(j, acc):
        xj = xpts_ref[j].astype(compute_dtype)
        cj = coef_ref[j].astype(compute_dtype)
        return acc + cj * jnp.maximum(x - xj, 0.0)

    f = jax.lax.fori_loop(0, n_pts, body, jnp.full_like(x, y0), unroll=4)
    o_ref[...] = f.astype(o_ref.dtype)


def fixed_width_relu_network(x, x_points, y_points):
    """Pallas wrapper mirroring FixedWidthReluNetwork.forward.

    x_points / y_points are treated as fixed module parameters (host constants),
    matching the PyTorch module's __init__.
    """
    # --- host-side parameter processing (module __init__ / calculate_slopes) ---
    xpts = np.asarray(x_points, np.float32)
    ypts = np.asarray(y_points, np.float32)
    n_pts = int(xpts.shape[0])
    assert n_pts >= 2, "need at least two breakpoints"

    slopes = (ypts[1:] - ypts[:-1]) / (xpts[1:] - xpts[:-1])
    coefs = np.concatenate([slopes[:1], slopes[1:] - slopes[:-1], -slopes[-1:]]).astype(np.float32)
    y0 = float(ypts[0])

    orig_shape = x.shape
    out_dtype = x.dtype
    itemsize = jnp.dtype(out_dtype).itemsize
    granule = _sublane_granule(out_dtype)
    compute_dtype = _compute_dtype_for(out_dtype)

    total = 1
    for d in orig_shape:
        total *= int(d)
    if total == 0:
        return x

    # --- lane-dense 2-D view of x; copy-free whenever 128-lane aligned ---
    padded = False
    if total % _LANE == 0:
        lane = _LANE
    elif len(orig_shape) >= 2 and orig_shape[-1] % 128 == 0 and orig_shape[-1] <= _MAX_NATIVE_LANE:
        lane = int(orig_shape[-1])
    elif total % 128 == 0:
        lane = 512 if total % 512 == 0 else (256 if total % 256 == 0 else 128)
    else:
        lane = _LANE
        padded = True

    if padded:
        rows = _cdiv(total, lane)
        pad = rows * lane - total          # only a < _LANE tail
        x2d = jnp.pad(x.reshape(-1), (0, pad)).reshape(rows, lane)
    else:
        rows = total // lane
        x2d = x.reshape(rows, lane)        # pure collapse of leading dims: no copy

    # --- row-tile selection: big (~4 MiB) blocks, granule-aligned, even grid ---
    max_rows = max(granule, (_TARGET_BLOCK_BYTES // (lane * itemsize)) // granule * granule)
    if rows <= granule:
        tile_rows = rows                   # tiny: single full-extent block (always legal)
    elif rows <= max_rows:
        # Whole array would fit one block; still split into >= 2 tiles for v7x's 2 TCs.
        tile_rows = _round_up(_cdiv(rows, 2), granule)
    else:
        n_tiles = _cdiv(rows, max_rows)
        if n_tiles % 2:
            n_tiles += 1                   # keep the parallel axis even across 2 TCs
        tile_rows = _round_up(_cdiv(rows, n_tiles), granule)
    grid_rows = _cdiv(rows, tile_rows)     # ragged last block is masked by the pipeline

    x_spec = pl.BlockSpec((tile_rows, lane), lambda r: (r, 0))
    out_spec = pl.BlockSpec((tile_rows, lane), lambda r: (r, 0))
    cost = pl.CostEstimate(
        flops=4 * n_pts * rows * lane,
        transcendentals=0,
        bytes_accessed=2 * rows * lane * itemsize,
    )
    cparams = pltpu.CompilerParams(
        dimension_semantics=("parallel",),
        vmem_limit_bytes=_VMEM_LIMIT_BYTES,
    )
    out_shape = jax.ShapeDtypeStruct((rows, lane), out_dtype)

    if n_pts <= _STATIC_UNROLL_MAX:
        kern = functools.partial(
            _pwl_const_kernel,
            y0,
            tuple(float(v) for v in xpts),
            tuple(float(v) for v in coefs),
            compute_dtype,
        )
        out2d = pl.pallas_call(
            kern,
            out_shape=out_shape,
            grid_spec=pl.GridSpec(grid=(grid_rows,), in_specs=[x_spec], out_specs=out_spec),
            compiler_params=cparams,
            cost_estimate=cost,
        )(x2d)
    else:
        smem_spec = pl.BlockSpec(memory_space=pltpu.MemorySpace.SMEM)
        kern = functools.partial(_pwl_table_kernel, n_pts, y0, compute_dtype)
        out2d = pl.pallas_call(
            kern,
            out_shape=out_shape,
            grid_spec=pl.GridSpec(
                grid=(grid_rows,),
                in_specs=[smem_spec, smem_spec, x_spec],
                out_specs=out_spec,
            ),
            compiler_params=cparams,
            cost_estimate=cost,
        )(jnp.asarray(xpts), jnp.asarray(coefs), x2d)

    if padded:
        return out2d.reshape(-1)[:total].reshape(orig_shape)
    return out2d.reshape(orig_shape)       # free: same element count, no copy


if __name__ == "__main__":
    key = jax.random.PRNGKey(0)
    k_y, k_y2, k_x1, k_x2, k_x3, k_x4, k_x5 = jax.random.split(key, 7)

    def reference(x, xpts, ypts):
        """Pure-JAX replica of the original (non-telescoped) PyTorch forward."""
        xpts = jnp.asarray(xpts, jnp.float32)
        ypts = jnp.asarray(ypts, jnp.float32)
        slopes = (ypts[1:] - ypts[:-1]) / (xpts[1:] - xpts[:-1])
        xf = x.astype(jnp.float32)
        f = jnp.full_like(xf, ypts[0])
        for i in range(int(xpts.shape[0]) - 1):
            f = f + slopes[i] * (
                jnp.maximum(xf - xpts[i], 0.0) - jnp.maximum(xf - xpts[i + 1], 0.0)
            )
        return f

    # "Module parameters": 5 breakpoints -> 4 ReLU segments (immediate-constant kernel path).
    n_points = 5
    x_points = jnp.linspace(-2.0, 2.0, n_points).astype(jnp.float32)
    y_points = jax.random.normal(k_y, (n_points,), dtype=jnp.float32)

    f32_cases = [
        (k_x1, (8, 256)),    # total % 1024 == 0: copy-free reshape, single block
        (k_x2, (5, 200)),    # ragged: minimal tail-pad fallback path
        (k_x3, (20, 512)),   # multi-tile grid with masked ragged last row-block
    ]
    for k, shape in f32_cases:
        x = 3.0 * jax.random.normal(k, shape, dtype=jnp.float32)
        out = jax.block_until_ready(fixed_width_relu_network(x, x_points, y_points))
        assert out.shape == x.shape and out.dtype == x.dtype
        ref = reference(x, x_points, y_points)
        assert jnp.allclose(out, ref, atol=1e-4, rtol=1e-5), f"mismatch vs reference {shape}"

    # bf16 input: exercises the (16,128) sublane granule (bf16 compute on v6e/v7x).
    xb = (1.5 * jax.random.normal(k_x4, (40, 512), dtype=jnp.float32)).astype(jnp.bfloat16)
    outb = jax.block_until_ready(fixed_width_relu_network(xb, x_points, y_points))
    assert outb.shape == xb.shape and outb.dtype == xb.dtype
    refb = reference(xb, x_points, y_points)
    assert jnp.allclose(outb.astype(jnp.float32), refb, atol=0.3, rtol=5e-2), "bf16 mismatch"

    # Many breakpoints: SMEM-table + fori_loop kernel path.
    n_big = 20
    xp_big = jnp.linspace(-3.0, 3.0, n_big).astype(jnp.float32)
    yp_big = jax.random.normal(k_y2, (n_big,), dtype=jnp.float32)
    xg = 4.0 * jax.random.normal(k_x5, (4, 256), dtype=jnp.float32)
    outg = jax.block_until_ready(fixed_width_relu_network(xg, xp_big, yp_big))
    assert jnp.allclose(outg, reference(xg, xp_big, yp_big), atol=1e-4, rtol=1e-4), "table-path mismatch"

    print("KERNEL_OK")
</pallas_src>

<mosaic_0001>
module attributes {stable_mosaic.version = 11 : i64} {
  func.func @_pwl_const_kernel(%arg0: i32, %arg1: memref<2x1024xf32, #tpu.memory_space<vmem>>, %arg2: memref<2x1024xf32, #tpu.memory_space<vmem>>) attributes {dimension_semantics = [#tpu.dimension_semantics<parallel>], iteration_bounds = array<i64: 1>, scalar_prefetch = 0 : i64, scratch_operands = 0 : i64, tpu.core_type = #tpu.core_type<tc>, window_params = [{transform_indices = @transform_0, window_bounds = array<i64: 2, 1024>}, {transform_indices = @transform_1, window_bounds = array<i64: 2, 1024>}]} {
    %c0 = arith.constant 0 : index
    %c0_0 = arith.constant 0 : index
    %0 = vector.load %arg1[%c0, %c0_0] : memref<2x1024xf32, #tpu.memory_space<vmem>>, vector<2x1024xf32>
    %cst = arith.constant 1.00401425 : f32
    %1 = vector.broadcast %cst : f32 to vector<2x1024xf32>
    %cst_1 = arith.constant -2.000000e+00 : f32
    %2 = vector.broadcast %cst_1 : f32 to vector<2x1024xf32>
    %3 = arith.subf %0, %2 : vector<2x1024xf32>
    %cst_2 = arith.constant 0.000000e+00 : f32
    %4 = vector.broadcast %cst_2 : f32 to vector<2x1024xf32>
    %5 = arith.maximumf %3, %4 : vector<2x1024xf32>
    %cst_3 = arith.constant -1.91035151 : f32
    %6 = vector.broadcast %cst_3 : f32 to vector<2x1024xf32>
    %7 = arith.mulf %6, %5 : vector<2x1024xf32>
    %8 = arith.addf %1, %7 : vector<2x1024xf32>
    %cst_4 = arith.constant -1.000000e+00 : f32
    %9 = vector.broadcast %cst_4 : f32 to vector<2x1024xf32>
    %10 = arith.subf %0, %9 : vector<2x1024xf32>
    %cst_5 = arith.constant 0.000000e+00 : f32
    %11 = vector.broadcast %cst_5 : f32 to vector<2x1024xf32>
    %12 = arith.maximumf %10, %11 : vector<2x1024xf32>
    %cst_6 = arith.constant 2.06851649 : f32
    %13 = vector.broadcast %cst_6 : f32 to vector<2x1024xf32>
    %14 = arith.mulf %13, %12 : vector<2x1024xf32>
    %15 = arith.addf %8, %14 : vector<2x1024xf32>
    %cst_7 = arith.constant 0.000000e+00 : f32
    %16 = vector.broadcast %cst_7 : f32 to vector<2x1024xf32>
    %17 = arith.subf %0, %16 : vector<2x1024xf32>
    %cst_8 = arith.constant 0.000000e+00 : f32
    %18 = vector.broadcast %cst_8 : f32 to vector<2x1024xf32>
    %19 = arith.maximumf %17, %18 : vector<2x1024xf32>
    %cst_9 = arith.constant -0.581359684 : f32
    %20 = vector.broadcast %cst_9 : f32 to vector<2x1024xf32>
    %21 = arith.mulf %20, %19 : vector<2x1024xf32>
    %22 = arith.addf %15, %21 : vector<2x1024xf32>
    %cst_10 = arith.constant 1.000000e+00 : f32
    %23 = vector.broadcast %cst_10 : f32 to vector<2x1024xf32>
    %24 = arith.subf %0, %23 : vector<2x1024xf32>
    %cst_11 = arith.constant 0.000000e+00 : f32
    %25 = vector.broadcast %cst_11 : f32 to vector<2x1024xf32>
    %26 = arith.maximumf %24, %25 : vector<2x1024xf32>
    %cst_12 = arith.constant 0.723328829 : f32
    %27 = vector.broadcast %cst_12 : f32 to vector<2x1024xf32>
    %28 = arith.mulf %27, %26 : vector<2x1024xf32>
    %29 = arith.addf %22, %28 : vector<2x1024xf32>
    %cst_13 = arith.constant 2.000000e+00 : f32
    %30 = vector.broadcast %cst_13 : f32 to vector<2x1024xf32>
    %31 = arith.subf %0, %30 : vector<2x1024xf32>
    %cst_14 = arith.constant 0.000000e+00 : f32
    %32 = vector.broadcast %cst_14 : f32 to vector<2x1024xf32>
    %33 = arith.maximumf %31, %32 : vector<2x1024xf32>
    %cst_15 = arith.constant -0.300134122 : f32
    %34 = vector.broadcast %cst_15 : f32 to vector<2x1024xf32>
    %35 = arith.mulf %34, %33 : vector<2x1024xf32>
    %36 = arith.addf %29, %35 : vector<2x1024xf32>
    %c0_16 = arith.constant 0 : index
    %c0_17 = arith.constant 0 : index
    %37 = vector.load %arg2[%c0_16, %c0_17] : memref<2x1024xf32, #tpu.memory_space<vmem>>, vector<2x1024xf32>
    tpu.vector_store %arg2[%c0_16, %c0_17], %36 {strides = array<i32>} : memref<2x1024xf32, #tpu.memory_space<vmem>>, vector<2x1024xf32>,
    return
  }
  func.func @transform_0(%arg0: i32) -> (i32, i32) {
    %c0_i32 = arith.constant 0 : i32
    %c0_i32_0 = arith.constant 0 : i32
    return %arg0, %c0_i32 : i32, i32
  }
  func.func @transform_1(%arg0: i32) -> (i32, i32) {
    %c0_i32 = arith.constant 0 : i32
    %c0_i32_0 = arith.constant 0 : i32
    return %arg0, %c0_i32 : i32, i32
  }
}

</mosaic_0001>

<llo_original>
// kernel: tpu_custom_call.1
$region0: #{tpu_custom_call.1}
  #allocation0 [shape = 'u32[]', space=smem, size = 0x4, offset = 0x4, fixed_abs, tag = 'smem constant byte address 0x4 - core index']
  #allocation1 [shape = 'u32[144,128]{1,0:T(1,128)}', space=vmem, size = 0x12000, scoped, tag = 'internal scratch']
  %s0 = inlined_call_operand.hbm [shape: f32[2,1024], index: 0, kind: input, shape index: {}]
  %s1 = inlined_call_operand.hbm [shape: f32[2,1024], index: 1, kind: output, shape index: {}]
  %s2 = sld [smem:[#allocation0]]
  $region18: #{tpu_custom_call.1} parent=0
    _
  %s4 = ssub.s32 1, %s2
  %s5 = scalar_select 0, %s4, %s2
  $region1: #{tpu_custom_call.1} parent=0
    #allocation2 [shape = 'u8[8192]{0}', space=vmem, size = 0x2000, scoped, tag = 'input window, operand 0, single buffered']
    #allocation3 [shape = 's32[1]{0}', space=sflag, size = 0x4, scoped, tag = 'scoped memory for tpu_custom_call.1']
    #allocation4 [shape = 's32[1]{0}', space=sflag, size = 0x4, scoped, tag = 'scoped memory for tpu_custom_call.1']
    #allocation5 [shape = 'u8[8192]{0}', space=vmem, size = 0x2000, scoped, tag = 'output window, operand 0, single buffered']
    %6 = vsyncpa [#allocation3], 0
    %7 = vsyncpa [#allocation4], 0
    // Predicated region
    $region2: #{tpu_custom_call.1} parent=1 // pred_check
      _
    $region3: #{tpu_custom_call.1} parent=1 // pred_check_branch
      %9 = sbr.rel (0) target = $region5
    $region4: #{tpu_custom_call.1} parent=1 // pred_region
      %s11 = ssub.s32 256, 256
      %12 = vsyncadd [#allocation3], %s11
      %s14 = sshll.u32 [#allocation2], 4
      %s15 = int_to_ptr.vmem [resolvable:$true] %s14
      %17 = dma.hbm_to_vmem [thread:$0]  %s0, 256, %s15, [#allocation3]
    $region5: #{tpu_custom_call.1} parent=1 // pred_fallthru
      _
    // Predicated region
    $region6: #{tpu_custom_call.1} parent=1 // pred_check
      _
    $region7: #{tpu_custom_call.1} parent=1 // pred_check_branch
      %19 = sbr.rel (0) target = $region9
    $region8: #{tpu_custom_call.1} parent=1 // pred_region
      %20 = dma.done [#allocation3], 256
    $region9: #{tpu_custom_call.1} parent=1 // pred_fallthru
      _
    %v21 = vld [vmem:[#allocation2] sm:$0xff]
    %v22 = vld [vmem:[#allocation2 + $0x8] sm:$0xff]
    %v23 = vsub.f32 %v21, -2.0
    %v24 = vsub.f32 %v22, -2.0
    %v25 = vmax.f32 %v23, 0.0
    %v26 = vmax.f32 %v24, 0.0
    %v27 = vmul.f32 %v25, -1.9103515
    %v28 = vmul.f32 %v26, -1.9103515
    %v29 = vadd.f32 %v27, 1.0040143
    %v30 = vadd.f32 %v28, 1.0040143
    %v31 = vsub.f32 %v21, -1.0
    %v32 = vsub.f32 %v22, -1.0
    %v33 = vmax.f32 %v31, 0.0
    %v34 = vmax.f32 %v32, 0.0
    %v35 = vmul.f32 %v33, 2.0685165
    %v36 = vmul.f32 %v34, 2.0685165
    %v37 = vadd.f32 %v29, %v35
    %v38 = vadd.f32 %v30, %v36
    %v39 = vmax.f32 %v21, 0.0
    %v40 = vmax.f32 %v22, 0.0
    %v41 = vmul.f32 %v39, -0.5813597
    %v42 = vmul.f32 %v40, -0.5813597
    %v43 = vadd.f32 %v37, %v41
    %v44 = vadd.f32 %v38, %v42
    %v45 = vsub.f32 %v21, 1.0
    %v46 = vsub.f32 %v22, 1.0
    %v47 = vmax.f32 %v45, 0.0
    %v48 = vmax.f32 %v46, 0.0
    %v49 = vmul.f32 %v47, 0.7233288
    %v50 = vmul.f32 %v48, 0.7233288
    %v51 = vadd.f32 %v43, %v49
    %v52 = vadd.f32 %v44, %v50
    %v53 = vsub.f32 %v21, 2.0
    %v54 = vsub.f32 %v22, 2.0
    %v55 = vmax.f32 %v53, 0.0
    %v56 = vmax.f32 %v54, 0.0
    %v57 = vmul.f32 %v55, -0.30013412
    %v58 = vmul.f32 %v56, -0.30013412
    %v59 = vadd.f32 %v51, %v57
    %v60 = vadd.f32 %v52, %v58
    %61 = vst [vmem:[#allocation5] sm:$0xff] %v59
    %62 = vst [vmem:[#allocation5 + $0x8] sm:$0xff] %v60
    // Predicated region
    $region10: #{tpu_custom_call.1} parent=1 // pred_check
      _
    $region11: #{tpu_custom_call.1} parent=1 // pred_check_branch
      %64 = sbr.rel (0) target = $region13
    $region12: #{tpu_custom_call.1} parent=1 // pred_region
      %s66 = ssub.s32 256, 256
      %67 = vsyncadd [#allocation4], %s66
      %s69 = sshll.u32 [#allocation5], 4
      %s70 = int_to_ptr.vmem [resolvable:$true] %s69
      %72 = dma.vmem_to_hbm [thread:$0]  %s70, 256, %s1, [#allocation4]
    $region13: #{tpu_custom_call.1} parent=1 // pred_fallthru
      _
    // Predicated region
    $region14: #{tpu_custom_call.1} parent=1 // pred_check
      _
    $region15: #{tpu_custom_call.1} parent=1 // pred_check_branch
      %74 = sbr.rel (0) target = $region17
    $region16: #{tpu_custom_call.1} parent=1 // pred_region
      %75 = dma.done [#allocation4], 256
    $region17: #{tpu_custom_call.1} parent=1 // pred_fallthru
      _
    %76 = vsyncpa [#allocation3], 1
    %77 = vsyncpa [#allocation4], 1

</llo_original>
